<compile_context>
chip_gen: v7x
topology: tpu7x:2x2x1
jax: 0.10.0
libtpu: 0.0.40
codegen_flags: <defaults>
</compile_context>

<pallas_src>
import jax
import jax.numpy as jnp
from jax import lax
from jax.experimental import pallas as pl
from jax.experimental.pallas import tpu as pltpu


# -----------------------------------------------------------------------------
# Kernel factory (H, W, C are static / closed over)
# -----------------------------------------------------------------------------
def make_mbblock_kernel(H, W, C):
    WC = W * C

    def kernel(xp_ref, x_ref, w1_ref, b1_ref, a1_ref, wd_ref, b2_ref, a2_ref,
               wp_ref, b3_ref, o_ref):
        xp = xp_ref[0]                       # (H+2, (W+2)*C) f32, SAME-padded
        x = x_ref[0]                         # (H, W*C)       f32, residual

        # ---- c1: dense 3x3 conv as 3 banded bf16 matmuls (MXU) --------------
        xpb = xp.astype(jnp.bfloat16)                            # cast once
        acc = None
        for ky in range(3):
            part = jnp.dot(xpb[ky:ky + H, :], w1_ref[ky],
                           preferred_element_type=jnp.float32)   # (H, W*C)
            acc = part if acc is None else acc + part
        y = acc + b1_ref[...]
        a1 = a1_ref[0, 0]
        y = jnp.where(y >= 0, y, a1 * y)                         # PReLU 1

        # ---- c_depth: depthwise 3x3 -----------------------------------------
        # H shifts: zero-row pad + sublane slices.  W shifts: 2 lane rolls on
        # the whole padded block (XLU); edge masking is baked into wd rows.
        zrow = jnp.zeros((1, WC), jnp.float32)
        ypad = jnp.concatenate([zrow, y, zrow], axis=0)          # (H+2, W*C)
        ypad_r = pltpu.roll(ypad, shift=C, axis=1)               # dx = -1 (kx=0)
        ypad_l = pltpu.roll(ypad, shift=WC - C, axis=1)          # dx = +1 (kx=2)
        shifted = (ypad_r, ypad, ypad_l)                         # indexed by kx
        wd = wd_ref[...]                                         # (9, W*C), edge-masked
        acc2 = None
        for ky in range(3):
            for kx in range(3):
                term = shifted[kx][ky:ky + H, :] * wd[ky * 3 + kx]
                acc2 = term if acc2 is None else acc2 + term
        z = acc2 + b2_ref[...]
        a2 = a2_ref[0, 0]
        z = jnp.where(z >= 0, z, a2 * z)                         # PReLU 2

        # ---- c_point: 1x1 conv as block-diagonal bf16 matmul + residual -----
        out = jnp.dot(z.astype(jnp.bfloat16), wp_ref[...],
                      preferred_element_type=jnp.float32) + b3_ref[...]
        o_ref[0] = (out + x).astype(o_ref.dtype)

    return kernel


# -----------------------------------------------------------------------------
# Wrapper
# -----------------------------------------------------------------------------
def mbblock_forward(x_nchw, params):
    """x_nchw: (N, C, H, W) float32; params: lane-dense kernel-layout weights."""
    N, C, H, W = x_nchw.shape
    WC, PWC = W * C, (W + 2) * C

    x_nhwc = jnp.transpose(x_nchw, (0, 2, 3, 1)).astype(jnp.float32)   # NHWC
    x_flat = x_nhwc.reshape(N, H, WC)                                   # residual
    xp_flat = jnp.pad(x_nhwc, ((0, 0), (1, 1), (1, 1), (0, 0))
                      ).reshape(N, H + 2, PWC)                          # pre-padded

    kernel = make_mbblock_kernel(H, W, C)
    full = lambda s: pl.BlockSpec(s, lambda n: (0,) * len(s))
    smem = pl.BlockSpec(memory_space=pltpu.MemorySpace.SMEM)

    out = pl.pallas_call(
        kernel,
        out_shape=jax.ShapeDtypeStruct((N, H, WC), jnp.float32),
        grid=(N,),
        in_specs=[
            pl.BlockSpec((1, H + 2, PWC), lambda n: (n, 0, 0)),   # padded input
            pl.BlockSpec((1, H, WC), lambda n: (n, 0, 0)),        # residual x
            full((3, PWC, WC)),                                   # c1 banded weight (bf16)
            full((1, WC)),                                        # c1 bias (lane-tiled)
            smem,                                                 # PReLU alpha1 (SMEM)
            full((9, WC)),                                        # depthwise taps (lane-tiled, edge-masked)
            full((1, WC)),                                        # depthwise bias
            smem,                                                 # PReLU alpha2 (SMEM)
            full((WC, WC)),                                       # 1x1 block-diag weight (bf16)
            full((1, WC)),                                        # 1x1 bias
        ],
        out_specs=pl.BlockSpec((1, H, WC), lambda n: (n, 0, 0)),
        compiler_params=pltpu.CompilerParams(
            dimension_semantics=("parallel",)),
    )(xp_flat, x_flat, params["w1_band"], params["b1t"], params["a1"],
      params["wdt"], params["bdt"], params["a2"],
      params["wp_big"], params["bpt"])

    return jnp.transpose(out.reshape(N, H, W, C), (0, 3, 1, 2))          # NCHW


# -----------------------------------------------------------------------------
# Deterministic parameter init (torch layout) + lane-dense kernel layout
# -----------------------------------------------------------------------------
def init_params(key, n_feats, W):
    C = n_feats
    WC = W * C
    ks = jax.random.split(key, 6)
    # torch-layout tensors
    w1_t = jax.random.normal(ks[0], (C, C, 3, 3), jnp.float32) * 0.1   # c1.weight
    b1_t = jax.random.normal(ks[1], (C,), jnp.float32) * 0.1           # c1.bias
    wd_t = jax.random.normal(ks[2], (C, 1, 3, 3), jnp.float32) * 0.1   # c_depth.weight
    bd_t = jax.random.normal(ks[3], (C,), jnp.float32) * 0.1           # c_depth.bias
    wp_t = jax.random.normal(ks[4], (C, C, 1, 1), jnp.float32) * 0.1   # c_point.weight
    bp_t = jax.random.normal(ks[5], (C,), jnp.float32) * 0.1           # c_point.bias
    a1 = jnp.full((1, 1), 0.25, jnp.float32)                           # PReLU default
    a2 = jnp.full((1, 1), 0.25, jnp.float32)

    # --- lane-dense kernel layout ---
    # c1: banded block-Toeplitz weights B_ky[(w+kx)*C+ci, w*C+co] = w1[ky,kx,ci,co]
    w1_hwio = jnp.transpose(w1_t, (2, 3, 1, 0))                        # (3,3,ci,co)
    bands = []
    for ky in range(3):
        Bk = jnp.zeros(((W + 2) * C, W * C), jnp.float32)
        for kx in range(3):
            S = jnp.zeros((W + 2, W), jnp.float32)
            S = S.at[jnp.arange(W) + kx, jnp.arange(W)].set(1.0)
            Bk = Bk + jnp.kron(S, w1_hwio[ky, kx])
        bands.append(Bk)
    w1_band = jnp.stack(bands).astype(jnp.bfloat16)                    # (3,(W+2)C,WC)

    # depthwise taps tiled across W: (9, W*C), [t, w*C+c] = wd[c,0,ky,kx]
    # W-edge masking baked into the weights so the kernel needs only rolls:
    #   kx=0 (dx=-1): first C lanes hold wrapped data  -> zero those taps
    #   kx=2 (dx=+1): last  C lanes hold wrapped data  -> zero those taps
    wd_taps = jnp.transpose(wd_t[:, 0], (1, 2, 0)).reshape(9, C)
    wdt = jnp.tile(wd_taps, (1, W))                                    # (9, W*C)
    lane = jnp.arange(WC)
    mask_kx0 = (lane >= C).astype(jnp.float32)                         # zero first C lanes
    mask_kx2 = (lane < WC - C).astype(jnp.float32)                     # zero last  C lanes
    row_kx = (jnp.arange(9) % 3)[:, None]
    row_mask = jnp.where(row_kx == 0, mask_kx0[None, :],
                         jnp.where(row_kx == 2, mask_kx2[None, :], 1.0))
    wdt = wdt * row_mask

    # 1x1 conv as block-diagonal (W*C, W*C) weight
    wp_ci_co = jnp.transpose(wp_t[:, :, 0, 0], (1, 0))
    wp_big = jnp.kron(jnp.eye(W, dtype=jnp.float32), wp_ci_co).astype(jnp.bfloat16)

    tile_c = lambda b: jnp.tile(b.reshape(1, C), (1, W))               # (1, W*C)

    kernel_params = dict(w1_band=w1_band, b1t=tile_c(b1_t), a1=a1,
                         wdt=wdt, bdt=tile_c(bd_t), a2=a2,
                         wp_big=wp_big, bpt=tile_c(bp_t))
    torch_params = dict(w1=w1_t, b1=b1_t, wd=wd_t, bd=bd_t, wp=wp_t, bp=bp_t,
                        a1=a1, a2=a2)
    return kernel_params, torch_params


# -----------------------------------------------------------------------------
# Pure-JAX f32 reference (NHWC convs) for correctness check
# -----------------------------------------------------------------------------
def reference_forward(x_nchw, tp):
    C = x_nchw.shape[1]
    x = jnp.transpose(x_nchw, (0, 2, 3, 1)).astype(jnp.float32)
    dn = ("NHWC", "HWIO", "NHWC")
    prelu = lambda v, a: jnp.where(v >= 0, v, a * v)

    w1 = jnp.transpose(tp["w1"], (2, 3, 1, 0))            # (3,3,ci,co)
    y = lax.conv_general_dilated(x, w1, (1, 1), "SAME",
                                 dimension_numbers=dn) + tp["b1"]
    y = prelu(y, tp["a1"][0, 0])

    wd = jnp.transpose(tp["wd"], (2, 3, 1, 0))            # (3,3,1,C)
    y = lax.conv_general_dilated(y, wd, (1, 1), "SAME",
                                 dimension_numbers=dn,
                                 feature_group_count=C) + tp["bd"]
    y = prelu(y, tp["a2"][0, 0])

    wp = jnp.transpose(tp["wp"], (2, 3, 1, 0))            # (1,1,ci,co)
    y = lax.conv_general_dilated(y, wp, (1, 1), "SAME",
                                 dimension_numbers=dn) + tp["bp"]
    y = y + x
    return jnp.transpose(y, (0, 3, 1, 2))


if __name__ == "__main__":
    N, n_feats, H, W = 2, 8, 16, 16          # W * n_feats = 128 -> lane dense
    key = jax.random.PRNGKey(0)
    kx, kp = jax.random.split(key)
    x = jax.random.normal(kx, (N, n_feats, H, W), jnp.float32)

    kernel_params, torch_params = init_params(kp, n_feats, W)

    out = jax.block_until_ready(mbblock_forward(x, kernel_params))
    ref = jax.block_until_ready(reference_forward(x, torch_params))

    assert out.shape == (N, n_feats, H, W)
    # bf16 MXU operands vs f32 reference -> allow small numerical slack.
    err = float(jnp.max(jnp.abs(out - ref)))
    assert err < 1e-2, err

    print("KERNEL_OK")
</pallas_src>

<mosaic_0001>
module attributes {stable_mosaic.version = 11 : i64} {
  func.func @kernel(%arg0: i32, %arg1: memref<1x18x144xf32, #tpu.memory_space<vmem>>, %arg2: memref<1x16x128xf32, #tpu.memory_space<vmem>>, %arg3: memref<3x144x128xbf16, #tpu.memory_space<vmem>>, %arg4: memref<1x128xf32, #tpu.memory_space<vmem>>, %arg5: memref<1x1xf32, #tpu.memory_space<smem>>, %arg6: memref<9x128xf32, #tpu.memory_space<vmem>>, %arg7: memref<1x128xf32, #tpu.memory_space<vmem>>, %arg8: memref<1x1xf32, #tpu.memory_space<smem>>, %arg9: memref<128x128xbf16, #tpu.memory_space<vmem>>, %arg10: memref<1x128xf32, #tpu.memory_space<vmem>>, %arg11: memref<1x16x128xf32, #tpu.memory_space<vmem>>) attributes {dimension_semantics = [#tpu.dimension_semantics<parallel>], iteration_bounds = array<i64: 2>, scalar_prefetch = 0 : i64, scratch_operands = 0 : i64, tpu.core_type = #tpu.core_type<tc>, window_params = [{transform_indices = @transform_0, window_bounds = array<i64: 1, 18, 144>}, {transform_indices = @transform_1, window_bounds = array<i64: 1, 16, 128>}, {pipeline_mode = #tpu.pipeline_mode<synchronous>, transform_indices = @transform_2, window_bounds = array<i64: 3, 144, 128>}, {pipeline_mode = #tpu.pipeline_mode<synchronous>, transform_indices = @transform_3, window_bounds = array<i64: 1, 128>}, {transform_indices = @transform_4, window_bounds = array<i64: 1, 1>}, {pipeline_mode = #tpu.pipeline_mode<synchronous>, transform_indices = @transform_5, window_bounds = array<i64: 9, 128>}, {pipeline_mode = #tpu.pipeline_mode<synchronous>, transform_indices = @transform_6, window_bounds = array<i64: 1, 128>}, {transform_indices = @transform_7, window_bounds = array<i64: 1, 1>}, {pipeline_mode = #tpu.pipeline_mode<synchronous>, transform_indices = @transform_8, window_bounds = array<i64: 128, 128>}, {pipeline_mode = #tpu.pipeline_mode<synchronous>, transform_indices = @transform_9, window_bounds = array<i64: 1, 128>}, {transform_indices = @transform_10, window_bounds = array<i64: 1, 16, 128>}]} {
    %c0 = arith.constant 0 : index
    %c0_0 = arith.constant 0 : index
    %c0_1 = arith.constant 0 : index
    %0 = vector.load %arg1[%c0, %c0_0, %c0_1] : memref<1x18x144xf32, #tpu.memory_space<vmem>>, vector<1x18x144xf32>
    %1 = vector.shape_cast %0 : vector<1x18x144xf32> to vector<18x144xf32>
    %c0_2 = arith.constant 0 : index
    %c0_3 = arith.constant 0 : index
    %c0_4 = arith.constant 0 : index
    %2 = vector.load %arg2[%c0_2, %c0_3, %c0_4] : memref<1x16x128xf32, #tpu.memory_space<vmem>>, vector<1x16x128xf32>
    %3 = vector.shape_cast %2 : vector<1x16x128xf32> to vector<16x128xf32>
    %4 = arith.truncf %1 : vector<18x144xf32> to vector<18x144xbf16>
    %5 = vector.extract_strided_slice %4 {offsets = [0, 0], sizes = [16, 144], strides = [1, 1]} : vector<18x144xbf16> to vector<16x144xbf16>
    %c0_5 = arith.constant 0 : index
    %c0_6 = arith.constant 0 : index
    %c0_7 = arith.constant 0 : index
    %6 = vector.load %arg3[%c0_5, %c0_6, %c0_7] : memref<3x144x128xbf16, #tpu.memory_space<vmem>>, vector<1x144x128xbf16>
    %7 = vector.shape_cast %6 : vector<1x144x128xbf16> to vector<144x128xbf16>
    %cst = arith.constant dense<0.000000e+00> : vector<16x128xf32>
    %8 = tpu.matmul %5, %7, %cst {dimension_numbers = #tpu.dot_dimension_numbers<[1], [0], [0], [1], [0, 0, 1, 1], [], []>} : vector<16x144xbf16>, vector<144x128xbf16>, vector<16x128xf32> -> vector<16x128xf32>
    %9 = vector.extract_strided_slice %4 {offsets = [1, 0], sizes = [16, 144], strides = [1, 1]} : vector<18x144xbf16> to vector<16x144xbf16>
    %c1 = arith.constant 1 : index
    %c0_8 = arith.constant 0 : index
    %c0_9 = arith.constant 0 : index
    %10 = vector.load %arg3[%c1, %c0_8, %c0_9] : memref<3x144x128xbf16, #tpu.memory_space<vmem>>, vector<1x144x128xbf16>
    %11 = vector.shape_cast %10 : vector<1x144x128xbf16> to vector<144x128xbf16>
    %cst_10 = arith.constant dense<0.000000e+00> : vector<16x128xf32>
    %12 = tpu.matmul %9, %11, %cst_10 {dimension_numbers = #tpu.dot_dimension_numbers<[1], [0], [0], [1], [0, 0, 1, 1], [], []>} : vector<16x144xbf16>, vector<144x128xbf16>, vector<16x128xf32> -> vector<16x128xf32>
    %13 = arith.addf %8, %12 : vector<16x128xf32>
    %14 = vector.extract_strided_slice %4 {offsets = [2, 0], sizes = [16, 144], strides = [1, 1]} : vector<18x144xbf16> to vector<16x144xbf16>
    %c2 = arith.constant 2 : index
    %c0_11 = arith.constant 0 : index
    %c0_12 = arith.constant 0 : index
    %15 = vector.load %arg3[%c2, %c0_11, %c0_12] : memref<3x144x128xbf16, #tpu.memory_space<vmem>>, vector<1x144x128xbf16>
    %16 = vector.shape_cast %15 : vector<1x144x128xbf16> to vector<144x128xbf16>
    %cst_13 = arith.constant dense<0.000000e+00> : vector<16x128xf32>
    %17 = tpu.matmul %14, %16, %cst_13 {dimension_numbers = #tpu.dot_dimension_numbers<[1], [0], [0], [1], [0, 0, 1, 1], [], []>} : vector<16x144xbf16>, vector<144x128xbf16>, vector<16x128xf32> -> vector<16x128xf32>
    %18 = arith.addf %13, %17 : vector<16x128xf32>
    %c0_14 = arith.constant 0 : index
    %c0_15 = arith.constant 0 : index
    %19 = vector.load %arg4[%c0_14, %c0_15] : memref<1x128xf32, #tpu.memory_space<vmem>>, vector<1x128xf32>
    %20 = vector.broadcast %19 : vector<1x128xf32> to vector<16x128xf32>
    %21 = arith.addf %18, %20 : vector<16x128xf32>
    %c0_16 = arith.constant 0 : index
    %c0_17 = arith.constant 0 : index
    %22 = memref.load %arg5[%c0_16, %c0_17] : memref<1x1xf32, #tpu.memory_space<smem>>
    %cst_18 = arith.constant 0.000000e+00 : f32
    %23 = vector.broadcast %cst_18 : f32 to vector<16x128xf32>
    %24 = arith.cmpf oge, %21, %23 : vector<16x128xf32>
    %25 = vector.broadcast %22 : f32 to vector<16x128xf32>
    %26 = arith.mulf %25, %21 : vector<16x128xf32>
    %27 = arith.select %24, %21, %26 : vector<16x128xi1>, vector<16x128xf32>
    %cst_19 = arith.constant 0.000000e+00 : f32
    %28 = vector.broadcast %cst_19 : f32 to vector<1x128xf32>
    %29 = tpu.concatenate %28, %27, %28 in 0 : vector<1x128xf32>, vector<16x128xf32>, vector<1x128xf32> -> vector<18x128xf32>
    %c8_i32 = arith.constant 8 : i32
    %30 = tpu.dynamic_rotate %29 by %c8_i32 dim 1 : vector<18x128xf32>, i32 -> vector<18x128xf32>
    %c120_i32 = arith.constant 120 : i32
    %31 = tpu.dynamic_rotate %29 by %c120_i32 dim 1 : vector<18x128xf32>, i32 -> vector<18x128xf32>
    %c0_20 = arith.constant 0 : index
    %c0_21 = arith.constant 0 : index
    %32 = vector.load %arg6[%c0_20, %c0_21] : memref<9x128xf32, #tpu.memory_space<vmem>>, vector<9x128xf32>
    %33 = vector.extract_strided_slice %30 {offsets = [0, 0], sizes = [16, 128], strides = [1, 1]} : vector<18x128xf32> to vector<16x128xf32>
    %34 = vector.extract_strided_slice %32 {offsets = [0, 0], sizes = [1, 128], strides = [1, 1]} : vector<9x128xf32> to vector<1x128xf32>
    %35 = vector.shape_cast %34 : vector<1x128xf32> to vector<128xf32>
    %36 = vector.shape_cast %35 : vector<128xf32> to vector<1x128xf32>
    %37 = vector.broadcast %36 : vector<1x128xf32> to vector<16x128xf32>
    %38 = arith.mulf %33, %37 : vector<16x128xf32>
    %39 = vector.extract_strided_slice %29 {offsets = [0, 0], sizes = [16, 128], strides = [1, 1]} : vector<18x128xf32> to vector<16x128xf32>
    %40 = vector.extract_strided_slice %32 {offsets = [1, 0], sizes = [1, 128], strides = [1, 1]} : vector<9x128xf32> to vector<1x128xf32>
    %41 = vector.shape_cast %40 : vector<1x128xf32> to vector<128xf32>
    %42 = vector.shape_cast %41 : vector<128xf32> to vector<1x128xf32>
    %43 = vector.broadcast %42 : vector<1x128xf32> to vector<16x128xf32>
    %44 = arith.mulf %39, %43 : vector<16x128xf32>
    %45 = arith.addf %38, %44 : vector<16x128xf32>
    %46 = vector.extract_strided_slice %31 {offsets = [0, 0], sizes = [16, 128], strides = [1, 1]} : vector<18x128xf32> to vector<16x128xf32>
    %47 = vector.extract_strided_slice %32 {offsets = [2, 0], sizes = [1, 128], strides = [1, 1]} : vector<9x128xf32> to vector<1x128xf32>
    %48 = vector.shape_cast %47 : vector<1x128xf32> to vector<128xf32>
    %49 = vector.shape_cast %48 : vector<128xf32> to vector<1x128xf32>
    %50 = vector.broadcast %49 : vector<1x128xf32> to vector<16x128xf32>
    %51 = arith.mulf %46, %50 : vector<16x128xf32>
    %52 = arith.addf %45, %51 : vector<16x128xf32>
    %53 = vector.extract_strided_slice %30 {offsets = [1, 0], sizes = [16, 128], strides = [1, 1]} : vector<18x128xf32> to vector<16x128xf32>
    %54 = vector.extract_strided_slice %32 {offsets = [3, 0], sizes = [1, 128], strides = [1, 1]} : vector<9x128xf32> to vector<1x128xf32>
    %55 = vector.shape_cast %54 : vector<1x128xf32> to vector<128xf32>
    %56 = vector.shape_cast %55 : vector<128xf32> to vector<1x128xf32>
    %57 = vector.broadcast %56 : vector<1x128xf32> to vector<16x128xf32>
    %58 = arith.mulf %53, %57 : vector<16x128xf32>
    %59 = arith.addf %52, %58 : vector<16x128xf32>
    %60 = vector.extract_strided_slice %29 {offsets = [1, 0], sizes = [16, 128], strides = [1, 1]} : vector<18x128xf32> to vector<16x128xf32>
    %61 = vector.extract_strided_slice %32 {offsets = [4, 0], sizes = [1, 128], strides = [1, 1]} : vector<9x128xf32> to vector<1x128xf32>
    %62 = vector.shape_cast %61 : vector<1x128xf32> to vector<128xf32>
    %63 = vector.shape_cast %62 : vector<128xf32> to vector<1x128xf32>
    %64 = vector.broadcast %63 : vector<1x128xf32> to vector<16x128xf32>
    %65 = arith.mulf %60, %64 : vector<16x128xf32>
    %66 = arith.addf %59, %65 : vector<16x128xf32>
    %67 = vector.extract_strided_slice %31 {offsets = [1, 0], sizes = [16, 128], strides = [1, 1]} : vector<18x128xf32> to vector<16x128xf32>
    %68 = vector.extract_strided_slice %32 {offsets = [5, 0], sizes = [1, 128], strides = [1, 1]} : vector<9x128xf32> to vector<1x128xf32>
    %69 = vector.shape_cast %68 : vector<1x128xf32> to vector<128xf32>
    %70 = vector.shape_cast %69 : vector<128xf32> to vector<1x128xf32>
    %71 = vector.broadcast %70 : vector<1x128xf32> to vector<16x128xf32>
    %72 = arith.mulf %67, %71 : vector<16x128xf32>
    %73 = arith.addf %66, %72 : vector<16x128xf32>
    %74 = vector.extract_strided_slice %30 {offsets = [2, 0], sizes = [16, 128], strides = [1, 1]} : vector<18x128xf32> to vector<16x128xf32>
    %75 = vector.extract_strided_slice %32 {offsets = [6, 0], sizes = [1, 128], strides = [1, 1]} : vector<9x128xf32> to vector<1x128xf32>
    %76 = vector.shape_cast %75 : vector<1x128xf32> to vector<128xf32>
    %77 = vector.shape_cast %76 : vector<128xf32> to vector<1x128xf32>
    %78 = vector.broadcast %77 : vector<1x128xf32> to vector<16x128xf32>
    %79 = arith.mulf %74, %78 : vector<16x128xf32>
    %80 = arith.addf %73, %79 : vector<16x128xf32>
    %81 = vector.extract_strided_slice %29 {offsets = [2, 0], sizes = [16, 128], strides = [1, 1]} : vector<18x128xf32> to vector<16x128xf32>
    %82 = vector.extract_strided_slice %32 {offsets = [7, 0], sizes = [1, 128], strides = [1, 1]} : vector<9x128xf32> to vector<1x128xf32>
    %83 = vector.shape_cast %82 : vector<1x128xf32> to vector<128xf32>
    %84 = vector.shape_cast %83 : vector<128xf32> to vector<1x128xf32>
    %85 = vector.broadcast %84 : vector<1x128xf32> to vector<16x128xf32>
    %86 = arith.mulf %81, %85 : vector<16x128xf32>
    %87 = arith.addf %80, %86 : vector<16x128xf32>
    %88 = vector.extract_strided_slice %31 {offsets = [2, 0], sizes = [16, 128], strides = [1, 1]} : vector<18x128xf32> to vector<16x128xf32>
    %89 = vector.extract_strided_slice %32 {offsets = [8, 0], sizes = [1, 128], strides = [1, 1]} : vector<9x128xf32> to vector<1x128xf32>
    %90 = vector.shape_cast %89 : vector<1x128xf32> to vector<128xf32>
    %91 = vector.shape_cast %90 : vector<128xf32> to vector<1x128xf32>
    %92 = vector.broadcast %91 : vector<1x128xf32> to vector<16x128xf32>
    %93 = arith.mulf %88, %92 : vector<16x128xf32>
    %94 = arith.addf %87, %93 : vector<16x128xf32>
    %c0_22 = arith.constant 0 : index
    %c0_23 = arith.constant 0 : index
    %95 = vector.load %arg7[%c0_22, %c0_23] : memref<1x128xf32, #tpu.memory_space<vmem>>, vector<1x128xf32>
    %96 = vector.broadcast %95 : vector<1x128xf32> to vector<16x128xf32>
    %97 = arith.addf %94, %96 : vector<16x128xf32>
    %c0_24 = arith.constant 0 : index
    %c0_25 = arith.constant 0 : index
    %98 = memref.load %arg8[%c0_24, %c0_25] : memref<1x1xf32, #tpu.memory_space<smem>>
    %cst_26 = arith.constant 0.000000e+00 : f32
    %99 = vector.broadcast %cst_26 : f32 to vector<16x128xf32>
    %100 = arith.cmpf oge, %97, %99 : vector<16x128xf32>
    %101 = vector.broadcast %98 : f32 to vector<16x128xf32>
    %102 = arith.mulf %101, %97 : vector<16x128xf32>
    %103 = arith.select %100, %97, %102 : vector<16x128xi1>, vector<16x128xf32>
    %104 = arith.truncf %103 : vector<16x128xf32> to vector<16x128xbf16>
    %c0_27 = arith.constant 0 : index
    %c0_28 = arith.constant 0 : index
    %105 = vector.load %arg9[%c0_27, %c0_28] : memref<128x128xbf16, #tpu.memory_space<vmem>>, vector<128x128xbf16>
    %cst_29 = arith.constant dense<0.000000e+00> : vector<16x128xf32>
    %106 = tpu.matmul %104, %105, %cst_29 {dimension_numbers = #tpu.dot_dimension_numbers<[1], [0], [0], [1], [0, 0, 1, 1], [], []>} : vector<16x128xbf16>, vector<128x128xbf16>, vector<16x128xf32> -> vector<16x128xf32>
    %c0_30 = arith.constant 0 : index
    %c0_31 = arith.constant 0 : index
    %107 = vector.load %arg10[%c0_30, %c0_31] : memref<1x128xf32, #tpu.memory_space<vmem>>, vector<1x128xf32>
    %108 = vector.broadcast %107 : vector<1x128xf32> to vector<16x128xf32>
    %109 = arith.addf %106, %108 : vector<16x128xf32>
    %110 = arith.addf %109, %3 : vector<16x128xf32>
    %c0_32 = arith.constant 0 : index
    %c0_33 = arith.constant 0 : index
    %c0_34 = arith.constant 0 : index
    %111 = vector.load %arg11[%c0_32, %c0_33, %c0_34] : memref<1x16x128xf32, #tpu.memory_space<vmem>>, vector<1x16x128xf32>
    %112 = vector.shape_cast %111 : vector<1x16x128xf32> to vector<16x128xf32>
    %113 = vector.shape_cast %110 : vector<16x128xf32> to vector<1x16x128xf32>
    tpu.vector_store %arg11[%c0_32, %c0_33, %c0_34], %113 {strides = array<i32>} : memref<1x16x128xf32, #tpu.memory_space<vmem>>, vector<1x16x128xf32>,
    return
  }
  func.func @transform_0(%arg0: i32) -> (i32, i32, i32) {
    %c0_i32 = arith.constant 0 : i32
    %c0_i32_0 = arith.constant 0 : i32
    %c0_i32_1 = arith.constant 0 : i32
    return %arg0, %c0_i32, %c0_i32_0 : i32, i32, i32
  }
  func.func @transform_1(%arg0: i32) -> (i32, i32, i32) {
    %c0_i32 = arith.constant 0 : i32
    %c0_i32_0 = arith.constant 0 : i32
    %c0_i32_1 = arith.constant 0 : i32
    return %arg0, %c0_i32, %c0_i32_0 : i32, i32, i32
  }
  func.func @transform_2(%arg0: i32) -> (i32, i32, i32) {
    %c0_i32 = arith.constant 0 : i32
    %c0_i32_0 = arith.constant 0 : i32
    %c0_i32_1 = arith.constant 0 : i32
    %c0_i32_2 = arith.constant 0 : i32
    return %c0_i32, %c0_i32_0, %c0_i32_1 : i32, i32, i32
  }
  func.func @transform_3(%arg0: i32) -> (i32, i32) {
    %c0_i32 = arith.constant 0 : i32
    %c0_i32_0 = arith.constant 0 : i32
    %c0_i32_1 = arith.constant 0 : i32
    return %c0_i32, %c0_i32_0 : i32, i32
  }
  func.func @transform_4(%arg0: i32) -> (i32, i32) {
    %c0_i32 = arith.constant 0 : i32
    %c0_i32_0 = arith.constant 0 : i32
    %c0_i32_1 = arith.constant 0 : i32
    return %c0_i32, %c0_i32_0 : i32, i32
  }
  func.func @transform_5(%arg0: i32) -> (i32, i32) {
    %c0_i32 = arith.constant 0 : i32
    %c0_i32_0 = arith.constant 0 : i32
    %c0_i32_1 = arith.constant 0 : i32
    return %c0_i32, %c0_i32_0 : i32, i32
  }
  func.func @transform_6(%arg0: i32) -> (i32, i32) {
    %c0_i32 = arith.constant 0 : i32
    %c0_i32_0 = arith.constant 0 : i32
    %c0_i32_1 = arith.constant 0 : i32
    return %c0_i32, %c0_i32_0 : i32, i32
  }
  func.func @transform_7(%arg0: i32) -> (i32, i32) {
    %c0_i32 = arith.constant 0 : i32
    %c0_i32_0 = arith.constant 0 : i32
    %c0_i32_1 = arith.constant 0 : i32
    return %c0_i32, %c0_i32_0 : i32, i32
  }
  func.func @transform_8(%arg0: i32) -> (i32, i32) {
    %c0_i32 = arith.constant 0 : i32
    %c0_i32_0 = arith.constant 0 : i32
    %c0_i32_1 = arith.constant 0 : i32
    return %c0_i32, %c0_i32_0 : i32, i32
  }
  func.func @transform_9(%arg0: i32) -> (i32, i32) {
    %c0_i32 = arith.constant 0 : i32
    %c0_i32_0 = arith.constant 0 : i32
    %c0_i32_1 = arith.constant 0 : i32
    return %c0_i32, %c0_i32_0 : i32, i32
  }
  func.func @transform_10(%arg0: i32) -> (i32, i32, i32) {
    %c0_i32 = arith.constant 0 : i32
    %c0_i32_0 = arith.constant 0 : i32
    %c0_i32_1 = arith.constant 0 : i32
    return %arg0, %c0_i32, %c0_i32_0 : i32, i32, i32
  }
}

</mosaic_0001>

<llo_original>
// kernel: tpu_custom_call.1
$region0: #{tpu_custom_call.1}
  #allocation0 [shape = 'u32[]', space=smem, size = 0x4, offset = 0x4, fixed_abs, tag = 'smem constant byte address 0x4 - core index']
  #allocation1 [shape = 'u32[144,128]{1,0:T(1,128)}', space=vmem, size = 0x12000, scoped, tag = 'internal scratch']
  #allocation2 [shape = 'f32[1,1]{1,0:T(1,128)S(6)}', space=smem, size = 0x200, scoped, tag = 'scoped memory for tpu_custom_call.1']
  #allocation3 [shape = 'f32[1,1]{1,0:T(1,128)S(6)}', space=smem, size = 0x200, scoped, tag = 'scoped memory for tpu_custom_call.1']
  %s0 = inlined_call_operand.vmem [shape: f32[2,18,144], index: 0, kind: input, shape index: {}]
  %s1 = inlined_call_operand.vmem [shape: f32[2,16,128], index: 1, kind: input, shape index: {}]
  %s2 = inlined_call_operand.hbm [shape: bf16[3,144,128], index: 2, kind: input, shape index: {}]
  %s3 = inlined_call_operand.vmem [shape: f32[1,128], index: 3, kind: input, shape index: {}]
  %s4 = inlined_call_operand.<no memory space> [shape: f32[1,1], index: 4, kind: input, shape index: {}]
  %s5 = inlined_call_operand.vmem [shape: f32[9,128], index: 5, kind: input, shape index: {}]
  %s6 = inlined_call_operand.vmem [shape: f32[1,128], index: 6, kind: input, shape index: {}]
  %s7 = inlined_call_operand.<no memory space> [shape: f32[1,1], index: 7, kind: input, shape index: {}]
  %s8 = inlined_call_operand.vmem [shape: bf16[128,128], index: 8, kind: input, shape index: {}]
  %s9 = inlined_call_operand.vmem [shape: f32[1,128], index: 9, kind: input, shape index: {}]
  %s10 = inlined_call_operand.hbm [shape: f32[2,16,128], index: 10, kind: output, shape index: {}]
  %s11 = sld [smem:[#allocation0]]
  $region77: #{tpu_custom_call.1} parent=0
    _
  %s13 = ssub.s32 1, %s11
  %s14 = scalar_select 0, %s13, %s11
  %15 = sst [smem:[#allocation2]] %s4
  %16 = sst [smem:[#allocation3]] %s7
  $region1: #{tpu_custom_call.1} parent=0
    #allocation4 [shape = 'u8[110592]{0}', space=vmem, size = 0x1b000, scoped, tag = 'input window, operand 2, single buffered']
    #allocation5 [shape = 's32[2]{0}', space=sflag, size = 0x8, scoped, tag = 'scoped memory for tpu_custom_call.1']
    #allocation6 [shape = 's32[2]{0}', space=sflag, size = 0x8, scoped, tag = 'scoped memory for tpu_custom_call.1']
    #allocation7 [shape = 'u8[16384]{0}', space=vmem, size = 0x4000, scoped, tag = 'output window, operand 0']
    %17 = vsyncpa [#allocation5], 0
    %18 = vsyncpa [#allocation6], 0
    %s19 = scalar_lea.sflag [#allocation6], 1
    %20 = vsyncpa %s19, 0
    loop: start=0, step=1, limit=4
    $region2: #{tpu_custom_call.1} parent=1 // loop_pre_header
      _
    $region3: #{tpu_custom_call.1} parent=1 // loop_header
      %s22 = sphi 0, %s26
      %p23 = scmp.ge.s32.totalorder %s22, 4
      %s32 = sphi 0, %s34
      %s35 = sphi 0, %s32
      %s36 = sphi 0, %s35
      %s52 = sphi 0, %s36
      %s58 = sphi 0, %s60
      %s61 = sphi 0, %s58
      %s62 = sphi 0, %s61
      %s78 = sphi 0, %s62
      %s82 = sphi 0, %s82
      %s84 = sphi 0, %s82
      %s85 = sphi 0, %s84
      %s99 = sphi 0, %s85
      %s103 = sphi 0, %s103
      %s105 = sphi 0, %s103
      %s106 = sphi 0, %s105
      %s120 = sphi 0, %s106
      %s124 = sphi 0, %s124
      %s126 = sphi 0, %s124
      %s127 = sphi 0, %s126
      %s141 = sphi 0, %s127
      %s145 = sphi 0, %s145
      %s147 = sphi 0, %s145
      %s148 = sphi 0, %s147
      %s162 = sphi 0, %s148
      %s166 = sphi 0, %s166
      %s168 = sphi 0, %s166
      %s169 = sphi 0, %s168
      %s183 = sphi 0, %s169
      %s187 = sphi 0, %s187
      %s189 = sphi 0, %s187
      %s190 = sphi 0, %s189
      %s204 = sphi 0, %s190
      %s208 = sphi 0, %s208
      %s210 = sphi 0, %s208
      %s211 = sphi 0, %s210
      %s225 = sphi 0, %s211
      %s229 = sphi 0, %s229
      %s231 = sphi 0, %s229
      %s232 = sphi 0, %s231
      %s246 = sphi 0, %s232
      %s252 = sphi 0, %s254
      %s255 = sphi 0, %s252
      %s256 = sphi 0, %s255
      %s272 = sphi 0, %s256
    $region4: #{tpu_custom_call.1} parent=1 // loop_header_branch
      %25 = sbr.rel (%p23) target = $region8
    $region5: #{tpu_custom_call.1} parent=1 // loop_body
      %s27 = ssub.s32 %s22, 1
      %s28 = ssub.s32 %s22, 2
      %s29 = sadd.s32 %s22, 1
      %s30 = ssub.s32 %s22, %s29
      %p31 = scmp.eq.s32.totalorder %s30, 0
      %s33 = sadd.s32 %s32, 1
      %s34 = scalar_select %p31, %s32, %s33
      %p37 = pneg %p31
      %p38 = scmp.eq.s32.totalorder %s22, 1
      %p39 = por %p37, %p38
      %p40 = scmp.ne.s32.totalorder %s32, %s35
      %p41 = scmp.eq.s32.totalorder %s22, 0
      %p42 = por %p40, %p41
      %p43 = scmp.ne.s32.totalorder %s32, %s35
      %p44 = scmp.eq.s32.totalorder %s27, 1
      %p45 = por %p43, %p44
      %p46 = scmp.ne.s32.totalorder %s35, %s36
      %p47 = scmp.eq.s32.totalorder %s27, 0
      %p48 = por %p46, %p47
      %p49 = scmp.ne.s32.totalorder %s35, %s36
      %p50 = scmp.eq.s32.totalorder %s28, 1
      %p51 = por %p49, %p50
      %p53 = scmp.ne.s32.totalorder %s36, %s52
      %p54 = scmp.eq.s32.totalorder %s28, 0
      %p55 = por %p53, %p54
      %s56 = ssub.s32 %s22, %s29
      %p57 = scmp.eq.s32.totalorder %s56, 0
      %s59 = sadd.s32 %s58, 1
      %s60 = scalar_select %p57, %s58, %s59
      %p63 = pneg %p57
      %p64 = scmp.eq.s32.totalorder %s22, 1
      %p65 = por %p63, %p64
      %p66 = scmp.ne.s32.totalorder %s58, %s61
      %p67 = scmp.eq.s32.totalorder %s22, 0
      %p68 = por %p66, %p67
      %p69 = scmp.ne.s32.totalorder %s58, %s61
      %p70 = scmp.eq.s32.totalorder %s27, 1
      %p71 = por %p69, %p70
      %p72 = scmp.ne.s32.totalorder %s61, %s62
      %p73 = scmp.eq.s32.totalorder %s27, 0
      %p74 = por %p72, %p73
      %p75 = scmp.ne.s32.totalorder %s61, %s62
      %p76 = scmp.eq.s32.totalorder %s28, 1
      %p77 = por %p75, %p76
      %p79 = scmp.ne.s32.totalorder %s62, %s78
      %p80 = scmp.eq.s32.totalorder %s28, 0
      %p81 = por %p79, %p80
      %s83 = sadd.s32 %s82, 1
      %p86 = scmp.eq.s32.totalorder %s22, 1
      %p87 = scmp.ne.s32.totalorder %s82, %s84
      %p88 = scmp.eq.s32.totalorder %s22, 0
      %p89 = por %p87, %p88
      %p90 = scmp.ne.s32.totalorder %s82, %s84
      %p91 = scmp.eq.s32.totalorder %s27, 1
      %p92 = por %p90, %p91
      %p93 = scmp.ne.s32.totalorder %s84, %s85
      %p94 = scmp.eq.s32.totalorder %s27, 0
      %p95 = por %p93, %p94
      %p96 = scmp.ne.s32.totalorder %s84, %s85
      %p97 = scmp.eq.s32.totalorder %s28, 1
      %p98 = por %p96, %p97
      %p100 = scmp.ne.s32.totalorder %s85, %s99
      %p101 = scmp.eq.s32.totalorder %s28, 0
      %p102 = por %p100, %p101
      %s104 = sadd.s32 %s103, 1
      %p107 = scmp.eq.s32.totalorder %s22, 1
      %p108 = scmp.ne.s32.totalorder %s103, %s105
      %p109 = scmp.eq.s32.totalorder %s22, 0
      %p110 = por %p108, %p109
      %p111 = scmp.ne.s32.totalorder %s103, %s105
      %p112 = scmp.eq.s32.totalorder %s27, 1
      %p113 = por %p111, %p112
      %p114 = scmp.ne.s32.totalorder %s105, %s106
      %p115 = scmp.eq.s32.totalorder %s27, 0
      %p116 = por %p114, %p115
      %p117 = scmp.ne.s32.totalorder %s105, %s106
      %p118 = scmp.eq.s32.totalorder %s28, 1
      %p119 = por %p117, %p118
      %p121 = scmp.ne.s32.totalorder %s106, %s120
      %p122 = scmp.eq.s32.totalorder %s28, 0
      %p123 = por %p121, %p122
      %s125 = sadd.s32 %s124, 1
      %p128 = scmp.eq.s32.totalorder %s22, 1
      %p129 = scmp.ne.s32.totalorder %s124, %s126
      %p130 = scmp.eq.s32.totalorder %s22, 0
      %p131 = por %p129, %p130
      %p132 = scmp.ne.s32.totalorder %s124, %s126
      %p133 = scmp.eq.s32.totalorder %s27, 1
      %p134 = por %p132, %p133
      %p135 = scmp.ne.s32.totalorder %s126, %s127
      %p136 = scmp.eq.s32.totalorder %s27, 0
      %p137 = por %p135, %p136
      %p138 = scmp.ne.s32.totalorder %s126, %s127
      %p139 = scmp.eq.s32.totalorder %s28, 1
      %p140 = por %p138, %p139
      %p142 = scmp.ne.s32.totalorder %s127, %s141
      %p143 = scmp.eq.s32.totalorder %s28, 0
      %p144 = por %p142, %p143
      %s146 = sadd.s32 %s145, 1
      %p149 = scmp.eq.s32.totalorder %s22, 1
      %p150 = scmp.ne.s32.totalorder %s145, %s147
      %p151 = scmp.eq.s32.totalorder %s22, 0
      %p152 = por %p150, %p151
      %p153 = scmp.ne.s32.totalorder %s145, %s147
      %p154 = scmp.eq.s32.totalorder %s27, 1
      %p155 = por %p153, %p154
      %p156 = scmp.ne.s32.totalorder %s147, %s148
      %p157 = scmp.eq.s32.totalorder %s27, 0
      %p158 = por %p156, %p157
      %p159 = scmp.ne.s32.totalorder %s147, %s148
      %p160 = scmp.eq.s32.totalorder %s28, 1
      %p161 = por %p159, %p160
      %p163 = scmp.ne.s32.totalorder %s148, %s162
      %p164 = scmp.eq.s32.totalorder %s28, 0
      %p165 = por %p163, %p164
      %s167 = sadd.s32 %s166, 1
      %p170 = scmp.eq.s32.totalorder %s22, 1
      %p171 = scmp.ne.s32.totalorder %s166, %s168
      %p172 = scmp.eq.s32.totalorder %s22, 0
      %p173 = por %p171, %p172
      %p174 = scmp.ne.s32.totalorder %s166, %s168
      %p175 = scmp.eq.s32.totalorder %s27, 1
      %p176 = por %p174, %p175
      %p177 = scmp.ne.s32.totalorder %s168, %s169
      %p178 = scmp.eq.s32.totalorder %s27, 0
      %p179 = por %p177, %p178
      %p180 = scmp.ne.s32.totalorder %s168, %s169
      %p181 = scmp.eq.s32.totalorder %s28, 1
      %p182 = por %p180, %p181
      %p184 = scmp.ne.s32.totalorder %s169, %s183
      %p185 = scmp.eq.s32.totalorder %s28, 0
      %p186 = por %p184, %p185
      %s188 = sadd.s32 %s187, 1
      %p191 = scmp.eq.s32.totalorder %s22, 1
      %p192 = scmp.ne.s32.totalorder %s187, %s189
      %p193 = scmp.eq.s32.totalorder %s22, 0
      %p194 = por %p192, %p193
      %p195 = scmp.ne.s32.totalorder %s187, %s189
      %p196 = scmp.eq.s32.totalorder %s27, 1
      %p197 = por %p195, %p196
      %p198 = scmp.ne.s32.totalorder %s189, %s190
      %p199 = scmp.eq.s32.totalorder %s27, 0
      %p200 = por %p198, %p199
      %p201 = scmp.ne.s32.totalorder %s189, %s190
      %p202 = scmp.eq.s32.totalorder %s28, 1
      %p203 = por %p201, %p202
      %p205 = scmp.ne.s32.totalorder %s190, %s204
      %p206 = scmp.eq.s32.totalorder %s28, 0
      %p207 = por %p205, %p206
      %s209 = sadd.s32 %s208, 1
      %p212 = scmp.eq.s32.totalorder %s22, 1
      %p213 = scmp.ne.s32.totalorder %s208, %s210
      %p214 = scmp.eq.s32.totalorder %s22, 0
      %p215 = por %p213, %p214
      %p216 = scmp.ne.s32.totalorder %s208, %s210
      %p217 = scmp.eq.s32.totalorder %s27, 1
      %p218 = por %p216, %p217
      %p219 = scmp.ne.s32.totalorder %s210, %s211
      %p220 = scmp.eq.s32.totalorder %s27, 0
      %p221 = por %p219, %p220
      %p222 = scmp.ne.s32.totalorder %s210, %s211
      %p223 = scmp.eq.s32.totalorder %s28, 1
      %p224 = por %p222, %p223
      %p226 = scmp.ne.s32.totalorder %s211, %s225
      %p227 = scmp.eq.s32.totalorder %s28, 0
      %p228 = por %p226, %p227
      %s230 = sadd.s32 %s229, 1
      %p233 = scmp.eq.s32.totalorder %s22, 1
      %p234 = scmp.ne.s32.totalorder %s229, %s231
      %p235 = scmp.eq.s32.totalorder %s22, 0
      %p236 = por %p234, %p235
      %p237 = scmp.ne.s32.totalorder %s229, %s231
      %p238 = scmp.eq.s32.totalorder %s27, 1
      %p239 = por %p237, %p238
      %p240 = scmp.ne.s32.totalorder %s231, %s232
      %p241 = scmp.eq.s32.totalorder %s27, 0
      %p242 = por %p240, %p241
      %p243 = scmp.ne.s32.totalorder %s231, %s232
      %p244 = scmp.eq.s32.totalorder %s28, 1
      %p245 = por %p243, %p244
      %p247 = scmp.ne.s32.totalorder %s232, %s246
      %p248 = scmp.eq.s32.totalorder %s28, 0
      %p249 = por %p247, %p248
      %s250 = ssub.s32 %s22, %s29
      %p251 = scmp.eq.s32.totalorder %s250, 0
      %s253 = sadd.s32 %s252, 1
      %s254 = scalar_select %p251, %s252, %s253
      %p257 = pneg %p251
      %p258 = scmp.eq.s32.totalorder %s22, 1
      %p259 = por %p257, %p258
      %p260 = scmp.ne.s32.totalorder %s252, %s255
      %p261 = scmp.eq.s32.totalorder %s22, 0
      %p262 = por %p260, %p261
      %p263 = scmp.ne.s32.totalorder %s252, %s255
      %p264 = scmp.eq.s32.totalorder %s27, 1
      %p265 = por %p263, %p264
      %p266 = scmp.ne.s32.totalorder %s255, %s256
      %p267 = scmp.eq.s32.totalorder %s27, 0
      %p268 = por %p266, %p267
      %p269 = scmp.ne.s32.totalorder %s255, %s256
      %p270 = scmp.eq.s32.totalorder %s28, 1
      %p271 = por %p269, %p270
      %p273 = scmp.ne.s32.totalorder %s256, %s272
      %p274 = scmp.eq.s32.totalorder %s28, 0
      %p275 = por %p273, %p274
      %p276 = scmp.le.s32.totalorder 1, %s22
      %p277 = scmp.lt.s32.totalorder %s22, 3
      %p278 = pnand %p276, %p277
      %p279 = pneg %p278
      // Predicated region
      $region9: #{tpu_custom_call.1} parent=5 // pred_check
        _
      $region10: #{tpu_custom_call.1} parent=5 // pred_check_branch
        %281 = sbr.rel (%p278) target = $region12
      $region11: #{tpu_custom_call.1} parent=5 // pred_region
        %s282 = ssub.s32 %s22, 1
        // Predicated region
        $region13: #{tpu_custom_call.1} parent=11 // pred_check
          %p283 = pneg %p95
        $region14: #{tpu_custom_call.1} parent=11 // pred_check_branch
          %285 = sbr.rel (%p283) target = $region16
        $region15: #{tpu_custom_call.1} parent=11 // pred_region
          %s287 = ssub.s32 3456, 3456
          %288 = vsyncadd [#allocation5], %s287
          %s289 = sshll.u32 [#allocation4], 4
          %s290 = int_to_ptr.vmem [resolvable:$true] %s289
          %295 = dma.hbm_to_vmem [thread:$0]  %s2, 3456, %s290, [#allocation5], 64, 64, 4
        $region16: #{tpu_custom_call.1} parent=11 // pred_fallthru
          _
        // Predicated region
        $region17: #{tpu_custom_call.1} parent=11 // pred_check
          %p296 = pneg %p116
        $region18: #{tpu_custom_call.1} parent=11 // pred_check_branch
          %298 = sbr.rel (%p296) target = $region20
        $region19: #{tpu_custom_call.1} parent=11 // pred_region
          _
        $region20: #{tpu_custom_call.1} parent=11 // pred_fallthru
          _
        // Predicated region
        $region21: #{tpu_custom_call.1} parent=11 // pred_check
          %p299 = pneg %p137
        $region22: #{tpu_custom_call.1} parent=11 // pred_check_branch
          %301 = sbr.rel (%p299) target = $region24
        $region23: #{tpu_custom_call.1} parent=11 // pred_region
          _
        $region24: #{tpu_custom_call.1} parent=11 // pred_fallthru
          _
        // Predicated region
        $region25: #{tpu_custom_call.1} parent=11 // pred_check
          %p302 = pneg %p158
        $region26: #{tpu_custom_call.1} parent=11 // pred_check_branch
          %304 = sbr.rel (%p302) target = $region28
        $region27: #{tpu_custom_call.1} parent=11 // pred_region
          _
        $region28: #{tpu_custom_call.1} parent=11 // pred_fallthru
          _
        // Predicated region
        $region29: #{tpu_custom_call.1} parent=11 // pred_check
          %p305 = pneg %p179
        $region30: #{tpu_custom_call.1} parent=11 // pred_check_branch
          %307 = sbr.rel (%p305) target = $region32
        $region31: #{tpu_custom_call.1} parent=11 // pred_region
          _
        $region32: #{tpu_custom_call.1} parent=11 // pred_fallthru
          _
        // Predicated region
        $region33: #{tpu_custom_call.1} parent=11 // pred_check
          %p308 = pneg %p200
        $region34: #{tpu_custom_call.1} parent=11 // pred_check_branch
          %310 = sbr.rel (%p308) target = $region36
        $region35: #{tpu_custom_call.1} parent=11 // pred_region
          _
        $region36: #{tpu_custom_call.1} parent=11 // pred_fallthru
          _
        // Predicated region
        $region37: #{tpu_custom_call.1} parent=11 // pred_check
          %p311 = pneg %p221
        $region38: #{tpu_custom_call.1} parent=11 // pred_check_branch
          %313 = sbr.rel (%p311) target = $region40
        $region39: #{tpu_custom_call.1} parent=11 // pred_region
          _
        $region40: #{tpu_custom_call.1} parent=11 // pred_fallthru
          _
        // Predicated region
        $region41: #{tpu_custom_call.1} parent=11 // pred_check
          %p314 = pneg %p242
        $region42: #{tpu_custom_call.1} parent=11 // pred_check_branch
          %316 = sbr.rel (%p314) target = $region44
        $region43: #{tpu_custom_call.1} parent=11 // pred_region
          _
        $region44: #{tpu_custom_call.1} parent=11 // pred_fallthru
          _
      $region12: #{tpu_custom_call.1} parent=5 // pred_fallthru
        _
      %p317 = scmp.lt.s32.totalorder %s22, 2
      // Predicated region
      $region45: #{tpu_custom_call.1} parent=5 // pred_check
        %p318 = pneg %p317
      $region46: #{tpu_custom_call.1} parent=5 // pred_check_branch
        %320 = sbr.rel (%p318) target = $region48
      $region47: #{tpu_custom_call.1} parent=5 // pred_region
        // Predicated region
        $region49: #{tpu_custom_call.1} parent=47 // pred_check
          %p321 = pneg %p42
        $region50: #{tpu_custom_call.1} parent=47 // pred_check_branch
          %323 = sbr.rel (%p321) target = $region52
        $region51: #{tpu_custom_call.1} parent=47 // pred_region
          %p324 = scmp.lt.s32.totalorder %s22, 1
          %s325 = scalar_select %p324, %s22, 1
          %s326 = smul.addr %s325, 6
          %s327 = smul.addr %s326, 8
          %s328 = scalar_lea.vmem %s0, %s327
        $region52: #{tpu_custom_call.1} parent=47 // pred_fallthru
          _
        // Predicated region
        $region53: #{tpu_custom_call.1} parent=47 // pred_check
          %p329 = pneg %p68
        $region54: #{tpu_custom_call.1} parent=47 // pred_check_branch
          %331 = sbr.rel (%p329) target = $region56
        $region55: #{tpu_custom_call.1} parent=47 // pred_region
          %p332 = scmp.lt.s32.totalorder %s22, 1
          %s333 = scalar_select %p332, %s22, 1
          %s334 = smul.addr %s333, 2
          %s335 = smul.addr %s334, 8
          %s336 = scalar_lea.vmem %s1, %s335
        $region56: #{tpu_custom_call.1} parent=47 // pred_fallthru
          _
      $region48: #{tpu_custom_call.1} parent=5 // pred_fallthru
        _
      %p337 = scmp.le.s32.totalorder 1, %s22
      %p338 = scmp.lt.s32.totalorder %s22, 3
      %p339 = pnand %p337, %p338
      %p340 = pneg %p339
      // Predicated region
      $region57: #{tpu_custom_call.1} parent=5 // pred_check
        _
      $region58: #{tpu_custom_call.1} parent=5 // pred_check_branch
        %342 = sbr.rel (%p339) target = $region60
      $region59: #{tpu_custom_call.1} parent=5 // pred_region
        %s343 = ssub.s32 %s22, 1
        // Predicated region
        $region61: #{tpu_custom_call.1} parent=59 // pred_check
          %p344 = pneg %p95
        $region62: #{tpu_custom_call.1} parent=59 // pred_check_branch
          %346 = sbr.rel (%p344) target = $region64
        $region63: #{tpu_custom_call.1} parent=59 // pred_region
          %347 = dma.done [#allocation5], 3456
        $region64: #{tpu_custom_call.1} parent=59 // pred_fallthru
          _
        %p348 = scmp.lt.s32.totalorder %s27, 1
        %s349 = scalar_select %p348, %s27, 1
        %s350 = smul.addr %s349, 6
        %s351 = smul.addr %s350, 8
        %s352 = scalar_lea.vmem %s0, %s351
        %p353 = pneg %p48
        %p354 = pneg %p45
        %p355 = scmp.lt.s32.totalorder %s27, 1
        %s356 = scalar_select %p355, %s27, 1
        %s357 = smul.addr %s356, 2
        %s358 = smul.addr %s357, 8
        %s359 = scalar_lea.vmem %s1, %s358
        %p360 = pneg %p74
        %p361 = pneg %p71
        %p362 = pneg %p95
        %p363 = pneg %p92
        %p364 = pneg %p116
        %p365 = pneg %p113
        %p366 = pneg %p137
        %p367 = pneg %p134
        %p368 = pneg %p158
        %p369 = pneg %p155
        %p370 = pneg %p179
        %p371 = pneg %p176
        %p372 = pneg %p200
        %p373 = pneg %p197
        %p374 = pneg %p221
        %p375 = pneg %p218
        %p376 = pneg %p242
        %p377 = pneg %p239
        %p378 = pneg %p268
        %p379 = pneg %p265
        %s380 = sand.u32 %s255, 1
        %s381 = scalar_lea.sflag [#allocation6], %s380
        %s382 = sand.u32 %s255, 1
        %s383 = smul.addr %s382, 16
        %s384 = scalar_lea.vmem [#allocation7], %s383
        %p385 = scmp.lt.s32.totalorder %s27, 1
        %s386 = scalar_select %p385, %s27, 1
        %s387 = smul.addr %s386, 6
        %s388 = smul.addr %s387, 8
        %s389 = scalar_lea.vmem %s0, %s388
        %p390 = scmp.lt.s32.totalorder %s27, 1
        %s391 = scalar_select %p390, %s27, 1
        %s392 = smul.addr %s391, 2
        %s393 = smul.addr %s392, 8
        %s394 = scalar_lea.vmem %s1, %s393
        %v396 = vld [vmem:[%s389] sm:$0xff]
        %v397 = vld [vmem:[%s389 + $0x8] sm:$0xff]
        %v398 = vld [vmem:[%s389 + $0x10] sm:$0xff]
        %v399 = vld [vmem:[%s389 + $0x18] sm:$0xff]
        %v400 = vld [vmem:[%s389 + $0x20] sm:$0x3]
        %v401 = vld [vmem:[%s389 + $0x28] sm:$0x3]
        %v402 = vld [vmem:[%s394] sm:$0xff]
        %v403 = vld [vmem:[%s394 + $0x8] sm:$0xff]
        %v404 = vpack.c.bf16 %v398, %v396
        %v405 = vpack.c.bf16 %v399, %v397
        %v406 = vpack.c.bf16 %v400, %v400
        %v407 = vpack.c.bf16 %v401, %v401
        %v408 = vld [vmem:[#allocation4] sm:$0xf]
        %v409 = vld [vmem:[#allocation4 + $0x4] sm:$0xf]
        %v410 = vld [vmem:[#allocation4 + $0x8] sm:$0xf]
        %v411 = vld [vmem:[#allocation4 + $0xc] sm:$0xf]
        %v412 = vld [vmem:[#allocation4 + $0x10] sm:$0xf]
        %v413 = vld [vmem:[#allocation4 + $0x14] sm:$0xf]
        %v414 = vld [vmem:[#allocation4 + $0x18] sm:$0xf]
        %v415 = vld [vmem:[#allocation4 + $0x1c] sm:$0xf]
        %v416 = vld [vmem:[#allocation4 + $0x20] sm:$0xf]
        %v417 = vld [vmem:[#allocation4 + $0x24] sm:$0xf]
        %v418 = vld [vmem:[#allocation4 + $0x28] sm:$0xf]
        %v419 = vld [vmem:[#allocation4 + $0x2c] sm:$0xf]
        %v420 = vld [vmem:[#allocation4 + $0x30] sm:$0xf]
        %v421 = vld [vmem:[#allocation4 + $0x34] sm:$0xf]
        %v422 = vld [vmem:[#allocation4 + $0x38] sm:$0xf]
        %v423 = vld [vmem:[#allocation4 + $0x3c] sm:$0xf]
        %v424 = vld [vmem:[#allocation4 + $0x40] sm:$0xf]
        %v425 = vld [vmem:[#allocation4 + $0x44] sm:$0xf]
        %s426 = scalar_lea.vmem [#allocation4], 72
        %v427 = vld [vmem:[%s426] sm:$0xf]
        %v428 = vld [vmem:[%s426 + $0x4] sm:$0xf]
        %v429 = vld [vmem:[%s426 + $0x8] sm:$0xf]
        %v430 = vld [vmem:[%s426 + $0xc] sm:$0xf]
        %v431 = vld [vmem:[%s426 + $0x10] sm:$0xf]
        %v432 = vld [vmem:[%s426 + $0x14] sm:$0xf]
        %v433 = vld [vmem:[%s426 + $0x18] sm:$0xf]
        %v434 = vld [vmem:[%s426 + $0x1c] sm:$0xf]
        %v435 = vld [vmem:[%s426 + $0x20] sm:$0xf]
        %v436 = vld [vmem:[%s426 + $0x24] sm:$0xf]
        %v437 = vld [vmem:[%s426 + $0x28] sm:$0xf]
        %v438 = vld [vmem:[%s426 + $0x2c] sm:$0xf]
        %v439 = vld [vmem:[%s426 + $0x30] sm:$0xf]
        %v440 = vld [vmem:[%s426 + $0x34] sm:$0xf]
        %v441 = vld [vmem:[%s426 + $0x38] sm:$0xf]
        %v442 = vld [vmem:[%s426 + $0x3c] sm:$0xf]
        %v443 = vld [vmem:[%s426 + $0x40] sm:$0xf]
        %v444 = vld [vmem:[%s426 + $0x44] sm:$0xf]
        %vm445 = vsmask.f32 7424
        %v447 = vshrl.u32 %v404, 16
        %v449 = vshll.u32 %v404, 16
        %v451 = vrot.slane %v449, 1
        %v452 = vor.u32 %v447, %v451
        %v454 = vshll.u32 %v406, 16
        %v456 = vrot.slane %v454, 1
        %v457 = vsel %vm445, %v452, %v456
        %v459 = vshrl.u32 %v405, 16
        %v461 = vshll.u32 %v405, 16
        %v463 = vrot.slane %v461, 1
        %v464 = vor.u32 %v459, %v463
        %v466 = vshll.u32 %v407, 16
        %v468 = vrot.slane %v466, 1
        %v469 = vsel %vm445, %v464, %v468
        %v489 = vunpack.c.l.b16 %v427
        %v490 = vunpack.c.l.b16 %v428
        %v491 = vunpack.c.l.b16 %v429
        %v492 = vunpack.c.l.b16 %v430
        %v493 = vunpack.c.l.b16 %v431
        %v494 = vunpack.c.l.b16 %v432
        %v495 = vunpack.c.l.b16 %v433
        %v496 = vunpack.c.l.b16 %v434
        %v497 = vunpack.c.l.b16 %v435
        %v498 = vunpack.c.l.b16 %v436
        %v499 = vunpack.c.l.b16 %v437
        %v500 = vunpack.c.l.b16 %v438
        %v501 = vunpack.c.l.b16 %v439
        %v502 = vunpack.c.l.b16 %v440
        %v503 = vunpack.c.l.b16 %v441
        %v504 = vunpack.c.l.b16 %v442
        %v505 = vunpack.c.l.b16 %v443
        %v506 = vunpack.c.l.b16 %v444
        %v507 = vpack.c.b16 %v490, %v489
        %v508 = vpack.c.b16 %v492, %v491
        %v509 = vpack.c.b16 %v494, %v493
        %v510 = vpack.c.b16 %v496, %v495
        %v511 = vpack.c.b16 %v498, %v497
        %v512 = vpack.c.b16 %v500, %v499
        %v513 = vpack.c.b16 %v502, %v501
        %v514 = vpack.c.b16 %v504, %v503
        %v515 = vpack.c.b16 %v506, %v505
        %vm525 = vcmask 130048
        %v527 = vsel %vm525, %v469, 0
        %529 = vmatprep.subr.bf16.mxu0 0
        %530 = vmatpush1.bf16.msra.mxu0 %v507
        %531 = vmatprep.subr.bf16.mxu0 0
        %532 = vmatpush1.bf16.msra.mxu0 %v508
        %533 = vmatprep.subr.bf16.mxu0 0
        %534 = vmatpush1.bf16.msra.mxu0 %v509
        %535 = vmatprep.subr.bf16.mxu0 0
        %536 = vmatpush1.bf16.msra.mxu0 %v510
        %537 = vmatprep.subr.bf16.mxu0 0
        %538 = vmatpush1.bf16.msra.mxu0 %v511
        %539 = vmatprep.subr.bf16.mxu0 0
        %540 = vmatpush1.bf16.msra.mxu0 %v512
        %541 = vmatprep.subr.bf16.mxu0 0
        %542 = vmatpush1.bf16.msra.mxu0 %v513
        %543 = vmatprep.subr.bf16.mxu0 0
        %544 = vmatpush1.bf16.msra.mxu0 %v514
        %545 = vmatprep.subr.bf16.mxu0 0
        %546 = vmatpush1.bf16.msra.mxu0 %v515
        %547 = vmatprep.subr.bf16.mxu0 0
        %548 = vmatpush1.bf16.msra.mxu0 0
        %549 = vmatprep.subr.bf16.mxu0 0
        %550 = vmatpush1.bf16.msra.mxu0 0
        %551 = vmatprep.subr.bf16.mxu0 0
        %552 = vmatpush1.bf16.msra.mxu0 0
        %553 = vmatprep.subr.bf16.mxu0 0
        %554 = vmatpush1.bf16.msra.mxu0 0
        %555 = vmatprep.subr.bf16.mxu0 0
        %556 = vmatpush1.bf16.msra.mxu0 0
        %557 = vmatprep.subr.bf16.mxu0 0
        %558 = vmatpush1.bf16.msra.mxu0 0
        %559 = vmatprep.subr.bf16.mxu0 0
        %560 = vmatpush1.bf16.msra.mxu0 0
        %561 = vmatprep.mubr.bf16.mxu0 %v527
        %562 = vmatmul.mubr.bf16.gmra.mrb[0].mxu0 %v457
        %v563 = vpop.f32.mrb[0].mxu0
        %v564 = vadd.f32 0.0, %v563
        %v565 = vpop.f32.mrb[0].mxu0
        %v566 = vpop.f32.mrb[0].mxu0
        %v567 = vadd.f32 0.0, %v566
        %v568 = vpop.f32.mrb[0].mxu0
        %569 = vdwg.mxu0
        %v588 = vunpack.c.l.b16 %v408
        %v589 = vunpack.c.l.b16 %v409
        %v590 = vunpack.c.l.b16 %v410
        %v591 = vunpack.c.l.b16 %v411
        %v592 = vunpack.c.l.b16 %v412
        %v593 = vunpack.c.l.b16 %v413
        %v594 = vunpack.c.l.b16 %v414
        %v595 = vunpack.c.l.b16 %v415
        %v596 = vunpack.c.l.b16 %v416
        %v597 = vunpack.c.l.b16 %v417
        %v598 = vunpack.c.l.b16 %v418
        %v599 = vunpack.c.l.b16 %v419
        %v600 = vunpack.c.l.b16 %v420
        %v601 = vunpack.c.l.b16 %v421
        %v602 = vunpack.c.l.b16 %v422
        %v603 = vunpack.c.l.b16 %v423
        %v604 = vunpack.c.l.b16 %v424
        %v605 = vunpack.c.l.b16 %v425
        %v606 = vpack.c.b16 %v589, %v588
        %v607 = vpack.c.b16 %v591, %v590
        %v608 = vpack.c.b16 %v593, %v592
        %v609 = vpack.c.b16 %v595, %v594
        %v610 = vpack.c.b16 %v597, %v596
        %v611 = vpack.c.b16 %v599, %v598
        %v612 = vpack.c.b16 %v601, %v600
        %v613 = vpack.c.b16 %v603, %v602
        %v614 = vpack.c.b16 %v605, %v604
        %v624 = vsel %vm525, %v405, 0
        %626 = vmatprep.subr.bf16.mxu0 0
        %627 = vmatpush1.bf16.msra.mxu0 %v606
        %628 = vmatprep.subr.bf16.mxu0 0
        %629 = vmatpush1.bf16.msra.mxu0 %v607
        %630 = vmatprep.subr.bf16.mxu0 0
        %631 = vmatpush1.bf16.msra.mxu0 %v608
        %632 = vmatprep.subr.bf16.mxu0 0
        %633 = vmatpush1.bf16.msra.mxu0 %v609
        %634 = vmatprep.subr.bf16.mxu0 0
        %635 = vmatpush1.bf16.msra.mxu0 %v610
        %636 = vmatprep.subr.bf16.mxu0 0
        %637 = vmatpush1.bf16.msra.mxu0 %v611
        %638 = vmatprep.subr.bf16.mxu0 0
        %639 = vmatpush1.bf16.msra.mxu0 %v612
        %640 = vmatprep.subr.bf16.mxu0 0
        %641 = vmatpush1.bf16.msra.mxu0 %v613
        %642 = vmatprep.subr.bf16.mxu0 0
        %643 = vmatpush1.bf16.msra.mxu0 %v614
        %644 = vmatprep.subr.bf16.mxu0 0
        %645 = vmatpush1.bf16.msra.mxu0 0
        %646 = vmatprep.subr.bf16.mxu0 0
        %647 = vmatpush1.bf16.msra.mxu0 0
        %648 = vmatprep.subr.bf16.mxu0 0
        %649 = vmatpush1.bf16.msra.mxu0 0
        %650 = vmatprep.subr.bf16.mxu0 0
        %651 = vmatpush1.bf16.msra.mxu0 0
        %652 = vmatprep.subr.bf16.mxu0 0
        %653 = vmatpush1.bf16.msra.mxu0 0
        %654 = vmatprep.subr.bf16.mxu0 0
        %655 = vmatpush1.bf16.msra.mxu0 0
        %656 = vmatprep.subr.bf16.mxu0 0
        %657 = vmatpush1.bf16.msra.mxu0 0
        %658 = vmatprep.mubr.bf16.mxu0 %v624
        %659 = vmatmul.mubr.bf16.gmra.mrb[0].mxu0 %v404
        %v660 = vpop.f32.mrb[0].mxu0
        %v661 = vadd.f32 %v564, %v660
        %v662 = vpop.f32.mrb[0].mxu0
        %v663 = vpop.f32.mrb[0].mxu0
        %v664 = vadd.f32 %v567, %v663
        %v665 = vpop.f32.mrb[0].mxu0
        %666 = vdwg.mxu0
        %s667 = scalar_lea.vmem [#allocation4], 144
        %v668 = vld [vmem:[%s667] sm:$0xf]
        %v669 = vld [vmem:[%s667 + $0x4] sm:$0xf]
        %v670 = vld [vmem:[%s667 + $0x8] sm:$0xf]
        %v671 = vld [vmem:[%s667 + $0xc] sm:$0xf]
        %v672 = vld [vmem:[%s667 + $0x10] sm:$0xf]
        %v673 = vld [vmem:[%s667 + $0x14] sm:$0xf]
        %v674 = vld [vmem:[%s667 + $0x18] sm:$0xf]
        %v675 = vld [vmem:[%s667 + $0x1c] sm:$0xf]
        %v676 = vld [vmem:[%s667 + $0x20] sm:$0xf]
        %v677 = vld [vmem:[%s667 + $0x24] sm:$0xf]
        %v678 = vld [vmem:[%s667 + $0x28] sm:$0xf]
        %v679 = vld [vmem:[%s667 + $0x2c] sm:$0xf]
        %v680 = vld [vmem:[%s667 + $0x30] sm:$0xf]
        %v681 = vld [vmem:[%s667 + $0x34] sm:$0xf]
        %v682 = vld [vmem:[%s667 + $0x38] sm:$0xf]
        %v683 = vld [vmem:[%s667 + $0x3c] sm:$0xf]
        %v684 = vld [vmem:[%s667 + $0x40] sm:$0xf]
        %v685 = vld [vmem:[%s667 + $0x44] sm:$0xf]
        %vm690 = vcmask 1046528
        %v691 = vrot.slane %v404, 1
        %v692 = vrot.slane %v406, 1
        %v693 = vsel %vm690, %v691, %v692
        %v694 = vrot.slane %v405, 1
        %v695 = vrot.slane %v407, 1
        %v696 = vsel %vm690, %v694, %v695
        %v716 = vunpack.c.l.b16 %v668
        %v717 = vunpack.c.l.b16 %v669
        %v718 = vunpack.c.l.b16 %v670
        %v719 = vunpack.c.l.b16 %v671
        %v720 = vunpack.c.l.b16 %v672
        %v721 = vunpack.c.l.b16 %v673
        %v722 = vunpack.c.l.b16 %v674
        %v723 = vunpack.c.l.b16 %v675
        %v724 = vunpack.c.l.b16 %v676
        %v725 = vunpack.c.l.b16 %v677
        %v726 = vunpack.c.l.b16 %v678
        %v727 = vunpack.c.l.b16 %v679
        %v728 = vunpack.c.l.b16 %v680
        %v729 = vunpack.c.l.b16 %v681
        %v730 = vunpack.c.l.b16 %v682
        %v731 = vunpack.c.l.b16 %v683
        %v732 = vunpack.c.l.b16 %v684
        %v733 = vunpack.c.l.b16 %v685
        %v734 = vpack.c.b16 %v717, %v716
        %v735 = vpack.c.b16 %v719, %v718
        %v736 = vpack.c.b16 %v721, %v720
        %v737 = vpack.c.b16 %v723, %v722
        %v738 = vpack.c.b16 %v725, %v724
        %v739 = vpack.c.b16 %v727, %v726
        %v740 = vpack.c.b16 %v729, %v728
        %v741 = vpack.c.b16 %v731, %v730
        %v742 = vpack.c.b16 %v733, %v732
        %v753 = vsel %vm525, %v696, 0
        %755 = vmatprep.subr.bf16.mxu0 0
        %756 = vmatpush1.bf16.msra.mxu0 %v734
        %757 = vmatprep.subr.bf16.mxu0 0
        %758 = vmatpush1.bf16.msra.mxu0 %v735
        %759 = vmatprep.subr.bf16.mxu0 0
        %760 = vmatpush1.bf16.msra.mxu0 %v736
        %761 = vmatprep.subr.bf16.mxu0 0
        %762 = vmatpush1.bf16.msra.mxu0 %v737
        %763 = vmatprep.subr.bf16.mxu0 0
        %764 = vmatpush1.bf16.msra.mxu0 %v738
        %765 = vmatprep.subr.bf16.mxu0 0
        %766 = vmatpush1.bf16.msra.mxu0 %v739
        %767 = vmatprep.subr.bf16.mxu0 0
        %768 = vmatpush1.bf16.msra.mxu0 %v740
        %769 = vmatprep.subr.bf16.mxu0 0
        %770 = vmatpush1.bf16.msra.mxu0 %v741
        %771 = vmatprep.subr.bf16.mxu0 0
        %772 = vmatpush1.bf16.msra.mxu0 %v742
        %773 = vmatprep.subr.bf16.mxu0 0
        %774 = vmatpush1.bf16.msra.mxu0 0
        %775 = vmatprep.subr.bf16.mxu0 0
        %776 = vmatpush1.bf16.msra.mxu0 0
        %777 = vmatprep.subr.bf16.mxu0 0
        %778 = vmatpush1.bf16.msra.mxu0 0
        %779 = vmatprep.subr.bf16.mxu0 0
        %780 = vmatpush1.bf16.msra.mxu0 0
        %781 = vmatprep.subr.bf16.mxu0 0
        %782 = vmatpush1.bf16.msra.mxu0 0
        %783 = vmatprep.subr.bf16.mxu0 0
        %784 = vmatpush1.bf16.msra.mxu0 0
        %785 = vmatprep.subr.bf16.mxu0 0
        %786 = vmatpush1.bf16.msra.mxu0 0
        %787 = vmatprep.mubr.bf16.mxu0 %v753
        %788 = vmatmul.mubr.bf16.gmra.mrb[0].mxu0 %v693
        %v789 = vpop.f32.mrb[0].mxu0
        %v790 = vadd.f32 0.0, %v789
        %v791 = vpop.f32.mrb[0].mxu0
        %v792 = vpop.f32.mrb[0].mxu0
        %v793 = vadd.f32 0.0, %v792
        %v794 = vpop.f32.mrb[0].mxu0
        %795 = vdwg.mxu0
        %v796 = vadd.f32 %v661, %v790
        %v797 = vadd.f32 %v664, %v793
        %v798 = vld [vmem:[%s3] sm:$0x1]
        %v800 = vlaneseq
        %v801 = vshrl.u32 %v800, 7
        %v802 = vsub.s32 0, %v801
        %v803 = vrot.slane %v798, %v802
        %v805 = vadd.f32 %v796, %v803
        %v806 = vadd.f32 %v797, %v803
        %s807 = sld [smem:[#allocation2]]
        %vm808 = vcmp.ge.f32.partialorder %v805, 0.0
        %vm809 = vcmp.ge.f32.partialorder %v806, 0.0
        %v810 = vstv %s807
        %v811 = vmul.f32 %v810, %v805
        %v812 = vmul.f32 %v810, %v806
        %v813 = vsel %vm808, %v805, %v811
        %v814 = vsel %vm809, %v806, %v812
        %vm817 = vcmask 1040384
        %v818 = vrot.slane %v813, 7
        %v819 = vrot.slane %v814, 7
        %v820 = vsel %vm817, %v818, %v819
        %v824 = vsel %vm817, 0.0, %v818
        %v825 = vsel %vm817, %v819, 0.0
        %826 = vrot.lane.b32.xlu0 %v824, 8
        %v827 = vpop.permute.xlu0 %826
        %828 = vrot.lane.b32.xlu0 %v820, 8
        %v829 = vpop.permute.xlu0 %828
        %830 = vrot.lane.b32.xlu0 %v825, 8
        %v831 = vpop.permute.xlu0 %830
        %832 = vrot.lane.b32.xlu0 %v824, 120
        %v833 = vpop.permute.xlu0 %832
        %834 = vrot.lane.b32.xlu0 %v820, 120
        %v835 = vpop.permute.xlu0 %834
        %836 = vrot.lane.b32.xlu0 %v825, 120
        %v837 = vpop.permute.xlu0 %836
        %v838 = vld [vmem:[%s5] sm:$0xff]
        %v839 = vld [vmem:[%s5 + $0x8] sm:$0x1]
        %v840 = vlaneseq
        %v841 = vshrl.u32 %v840, 7
        %v842 = vsub.s32 0, %v841
        %v843 = vrot.slane %v838, %v842
        %v844 = vmul.f32 %v827, %v843
        %v845 = vmul.f32 %v829, %v843
        %v846 = vlaneseq
        %v847 = vshrl.u32 %v846, 7
        %v848 = vsub.s32 1, %v847
        %v849 = vrot.slane %v838, %v848
        %v850 = vmul.f32 %v824, %v849
        %v851 = vmul.f32 %v820, %v849
        %v852 = vadd.f32 %v844, %v850
        %v853 = vadd.f32 %v845, %v851
        %v854 = vlaneseq
        %v855 = vshrl.u32 %v854, 7
        %v856 = vsub.s32 2, %v855
        %v857 = vrot.slane %v838, %v856
        %v858 = vmul.f32 %v833, %v857
        %v859 = vmul.f32 %v835, %v857
        %v860 = vadd.f32 %v852, %v858
        %v861 = vadd.f32 %v853, %v859
        %v862 = vlaneseq
        %v863 = vshrl.u32 %v862, 7
        %v864 = vsub.s32 3, %v863
        %v865 = vrot.slane %v838, %v864
        %v866 = vmul.f32 %v827, %v865
        %v867 = vmul.f32 %v829, %v865
        %v868 = vmul.f32 %v831, %v865
        %vm872 = vcmask 1046528
        %v873 = vrot.slane %v866, 1
        %v874 = vrot.slane %v867, 1
        %v875 = vsel %vm872, %v873, %v874
        %v876 = vrot.slane %v868, 1
        %v877 = vsel %vm872, %v874, %v876
        %v880 = vadd.f32 %v860, %v875
        %v881 = vadd.f32 %v861, %v877
        %v882 = vlaneseq
        %v883 = vshrl.u32 %v882, 7
        %v884 = vsub.s32 4, %v883
        %v885 = vrot.slane %v838, %v884
        %v886 = vmul.f32 %v824, %v885
        %v887 = vmul.f32 %v820, %v885
        %v888 = vmul.f32 %v825, %v885
        %v892 = vrot.slane %v886, 1
        %v893 = vrot.slane %v887, 1
        %v894 = vsel %vm872, %v892, %v893
        %v895 = vrot.slane %v888, 1
        %v896 = vsel %vm872, %v893, %v895
        %v899 = vadd.f32 %v880, %v894
        %v900 = vadd.f32 %v881, %v896
        %v901 = vlaneseq
        %v902 = vshrl.u32 %v901, 7
        %v903 = vsub.s32 5, %v902
        %v904 = vrot.slane %v838, %v903
        %v905 = vmul.f32 %v833, %v904
        %v906 = vmul.f32 %v835, %v904
        %v907 = vmul.f32 %v837, %v904
        %v911 = vrot.slane %v905, 1
        %v912 = vrot.slane %v906, 1
        %v913 = vsel %vm872, %v911, %v912
        %v914 = vrot.slane %v907, 1
        %v915 = vsel %vm872, %v912, %v914
        %v918 = vadd.f32 %v899, %v913
        %v919 = vadd.f32 %v900, %v915
        %v920 = vlaneseq
        %v921 = vshrl.u32 %v920, 7
        %v922 = vsub.s32 6, %v921
        %v923 = vrot.slane %v838, %v922
        %v924 = vmul.f32 %v827, %v923
        %v925 = vmul.f32 %v829, %v923
        %v926 = vmul.f32 %v831, %v923
        %vm930 = vcmask 1045504
        %v931 = vrot.slane %v924, 2
        %v932 = vrot.slane %v925, 2
        %v933 = vsel %vm930, %v931, %v932
        %v934 = vrot.slane %v926, 2
        %v935 = vsel %vm930, %v932, %v934
        %v938 = vadd.f32 %v918, %v933
        %v939 = vadd.f32 %v919, %v935
        %v940 = vlaneseq
        %v941 = vshrl.u32 %v940, 7
        %v942 = vsub.s32 7, %v941
        %v943 = vrot.slane %v838, %v942
        %v944 = vmul.f32 %v824, %v943
        %v945 = vmul.f32 %v820, %v943
        %v946 = vmul.f32 %v825, %v943
        %v950 = vrot.slane %v944, 2
        %v951 = vrot.slane %v945, 2
        %v952 = vsel %vm930, %v950, %v951
        %v953 = vrot.slane %v946, 2
        %v954 = vsel %vm930, %v951, %v953
        %v957 = vadd.f32 %v938, %v952
        %v958 = vadd.f32 %v939, %v954
        %v959 = vlaneseq
        %v960 = vshrl.u32 %v959, 7
        %v961 = vsub.s32 0, %v960
        %v962 = vrot.slane %v839, %v961
        %v963 = vmul.f32 %v833, %v962
        %v964 = vmul.f32 %v835, %v962
        %v965 = vmul.f32 %v837, %v962
        %v969 = vrot.slane %v963, 2
        %v970 = vrot.slane %v964, 2
        %v971 = vsel %vm930, %v969, %v970
        %v972 = vrot.slane %v965, 2
        %v973 = vsel %vm930, %v970, %v972
        %v976 = vadd.f32 %v957, %v971
        %v977 = vadd.f32 %v958, %v973
        %v978 = vld [vmem:[%s6] sm:$0x1]
        %v980 = vlaneseq
        %v981 = vshrl.u32 %v980, 7
        %v982 = vsub.s32 0, %v981
        %v983 = vrot.slane %v978, %v982
        %v985 = vadd.f32 %v976, %v983
        %v986 = vadd.f32 %v977, %v983
        %s987 = sld [smem:[#allocation3]]
        %vm988 = vcmp.ge.f32.partialorder %v985, 0.0
        %vm989 = vcmp.ge.f32.partialorder %v986, 0.0
        %v990 = vstv %s987
        %v991 = vmul.f32 %v990, %v985
        %v992 = vmul.f32 %v990, %v986
        %v993 = vsel %vm988, %v985, %v991
        %v994 = vsel %vm989, %v986, %v992
        %v995 = vpack.c.bf16 %v994, %v993
        %v996 = vld [vmem:[%s8] sm:$0xf]
        %v997 = vld [vmem:[%s8 + $0x4] sm:$0xf]
        %v998 = vld [vmem:[%s8 + $0x8] sm:$0xf]
        %v999 = vld [vmem:[%s8 + $0xc] sm:$0xf]
        %v1000 = vld [vmem:[%s8 + $0x10] sm:$0xf]
        %v1001 = vld [vmem:[%s8 + $0x14] sm:$0xf]
        %v1002 = vld [vmem:[%s8 + $0x18] sm:$0xf]
        %v1003 = vld [vmem:[%s8 + $0x1c] sm:$0xf]
        %v1004 = vld [vmem:[%s8 + $0x20] sm:$0xf]
        %v1005 = vld [vmem:[%s8 + $0x24] sm:$0xf]
        %v1006 = vld [vmem:[%s8 + $0x28] sm:$0xf]
        %v1007 = vld [vmem:[%s8 + $0x2c] sm:$0xf]
        %v1008 = vld [vmem:[%s8 + $0x30] sm:$0xf]
        %v1009 = vld [vmem:[%s8 + $0x34] sm:$0xf]
        %v1010 = vld [vmem:[%s8 + $0x38] sm:$0xf]
        %v1011 = vld [vmem:[%s8 + $0x3c] sm:$0xf]
        %v1012 = vld [vmem:[%s9] sm:$0x1]
        %v1014 = vlaneseq
        %v1015 = vshrl.u32 %v1014, 7
        %v1016 = vsub.s32 0, %v1015
        %v1017 = vrot.slane %v1012, %v1016
        %v1035 = vunpack.c.l.b16 %v996
        %v1036 = vunpack.c.l.b16 %v997
        %v1037 = vunpack.c.l.b16 %v998
        %v1038 = vunpack.c.l.b16 %v999
        %v1039 = vunpack.c.l.b16 %v1000
        %v1040 = vunpack.c.l.b16 %v1001
        %v1041 = vunpack.c.l.b16 %v1002
        %v1042 = vunpack.c.l.b16 %v1003
        %v1043 = vunpack.c.l.b16 %v1004
        %v1044 = vunpack.c.l.b16 %v1005
        %v1045 = vunpack.c.l.b16 %v1006
        %v1046 = vunpack.c.l.b16 %v1007
        %v1047 = vunpack.c.l.b16 %v1008
        %v1048 = vunpack.c.l.b16 %v1009
        %v1049 = vunpack.c.l.b16 %v1010
        %v1050 = vunpack.c.l.b16 %v1011
        %v1051 = vpack.c.b16 %v1036, %v1035
        %v1052 = vpack.c.b16 %v1038, %v1037
        %v1053 = vpack.c.b16 %v1040, %v1039
        %v1054 = vpack.c.b16 %v1042, %v1041
        %v1055 = vpack.c.b16 %v1044, %v1043
        %v1056 = vpack.c.b16 %v1046, %v1045
        %v1057 = vpack.c.b16 %v1048, %v1047
        %v1058 = vpack.c.b16 %v1050, %v1049
        %1067 = vmatprep.subr.bf16.mxu0 0
        %1068 = vmatpush1.bf16.msra.mxu0 %v1051
        %1069 = vmatprep.subr.bf16.mxu0 0
        %1070 = vmatpush1.bf16.msra.mxu0 %v1052
        %1071 = vmatprep.subr.bf16.mxu0 0
        %1072 = vmatpush1.bf16.msra.mxu0 %v1053
        %1073 = vmatprep.subr.bf16.mxu0 0
        %1074 = vmatpush1.bf16.msra.mxu0 %v1054
        %1075 = vmatprep.subr.bf16.mxu0 0
        %1076 = vmatpush1.bf16.msra.mxu0 %v1055
        %1077 = vmatprep.subr.bf16.mxu0 0
        %1078 = vmatpush1.bf16.msra.mxu0 %v1056
        %1079 = vmatprep.subr.bf16.mxu0 0
        %1080 = vmatpush1.bf16.msra.mxu0 %v1057
        %1081 = vmatprep.subr.bf16.mxu0 0
        %1082 = vmatpush1.bf16.msra.mxu0 %v1058
        %1083 = vmatprep.subr.bf16.mxu0 0
        %1084 = vmatpush1.bf16.msra.mxu0 0
        %1085 = vmatprep.subr.bf16.mxu0 0
        %1086 = vmatpush1.bf16.msra.mxu0 0
        %1087 = vmatprep.subr.bf16.mxu0 0
        %1088 = vmatpush1.bf16.msra.mxu0 0
        %1089 = vmatprep.subr.bf16.mxu0 0
        %1090 = vmatpush1.bf16.msra.mxu0 0
        %1091 = vmatprep.subr.bf16.mxu0 0
        %1092 = vmatpush1.bf16.msra.mxu0 0
        %1093 = vmatprep.subr.bf16.mxu0 0
        %1094 = vmatpush1.bf16.msra.mxu0 0
        %1095 = vmatprep.subr.bf16.mxu0 0
        %1096 = vmatpush1.bf16.msra.mxu0 0
        %1097 = vmatprep.subr.bf16.mxu0 0
        %1098 = vmatpush1.bf16.msra.mxu0 0
        %1099 = vmatprep.mubr.bf16.mxu0 0
        %1100 = vmatmul.mubr.bf16.gmra.mrb[0].mxu0 %v995
        %v1101 = vpop.f32.mrb[0].mxu0
        %v1102 = vadd.f32 %v1017, %v1101
        %v1103 = vpop.f32.mrb[0].mxu0
        %v1104 = vpop.f32.mrb[0].mxu0
        %v1105 = vadd.f32 %v1017, %v1104
        %v1106 = vpop.f32.mrb[0].mxu0
        %1107 = vdwg.mxu0
        %v1108 = vadd.f32 %v1102, %v402
        %v1109 = vadd.f32 %v1105, %v403
        %1110 = vst [vmem:[%s384] sm:$0xff] %v1108
        %1111 = vst [vmem:[%s384 + $0x8] sm:$0xff] %v1109
        %s1112 = sand.u32 %s255, 1
        %s1113 = scalar_lea.sflag [#allocation6], %s1112
        %s1114 = sand.u32 %s255, 1
        %s1115 = smul.addr %s1114, 16
        %s1116 = scalar_lea.vmem [#allocation7], %s1115
        // Predicated region
        $region65: #{tpu_custom_call.1} parent=59 // pred_check
          %p1117 = pneg %p265
        $region66: #{tpu_custom_call.1} parent=59 // pred_check_branch
          %1119 = sbr.rel (%p1117) target = $region68
        $region67: #{tpu_custom_call.1} parent=59 // pred_region
          %s1121 = ssub.s32 256, 256
          %1122 = vsyncadd %s1113, %s1121
          %s1123 = smul.addr %s27, 2
          %s1124 = smul.addr %s1123, 128
          %s1125 = scalar_lea.hbm %s10, %s1124
          %s1126 = sshll.u32 %s1116, 4
          %s1127 = int_to_ptr.vmem [resolvable:$true] %s1126
          %1132 = dma.vmem_to_hbm [thread:$0]  %s1127, 256, %s1125, %s1113, 128, 128, 8
        $region68: #{tpu_custom_call.1} parent=59 // pred_fallthru
          _
      $region60: #{tpu_custom_call.1} parent=5 // pred_fallthru
        _
      %p1133 = scmp.le.s32.totalorder 2, %s22
      // Predicated region
      $region69: #{tpu_custom_call.1} parent=5 // pred_check
        %p1134 = pneg %p1133
      $region70: #{tpu_custom_call.1} parent=5 // pred_check_branch
        %1136 = sbr.rel (%p1134) target = $region72
      $region71: #{tpu_custom_call.1} parent=5 // pred_region
        %s1137 = ssub.s32 %s22, 2
        // Predicated region
        $region73: #{tpu_custom_call.1} parent=71 // pred_check
          %p1138 = pneg %p271
        $region74: #{tpu_custom_call.1} parent=71 // pred_check_branch
          %1140 = sbr.rel (%p1138) target = $region76
        $region75: #{tpu_custom_call.1} parent=71 // pred_region
          %s1141 = sand.u32 %s256, 1
          %s1142 = scalar_lea.sflag [#allocation6], %s1141
          %s1143 = sand.u32 %s256, 1
          %s1144 = smul.addr %s1143, 16
          %s1145 = scalar_lea.vmem [#allocation7], %s1144
          %1146 = dma.done %s1142, 256
        $region76: #{tpu_custom_call.1} parent=71 // pred_fallthru
          _
      $region72: #{tpu_custom_call.1} parent=5 // pred_fallthru
        _
    $region6: #{tpu_custom_call.1} parent=1 // loop_footer
      %s26 = sadd.s32 1, %s22
    $region7: #{tpu_custom_call.1} parent=1 // loop_footer_branch
      %21 = sbr.rel target = $region3
    $region8: #{tpu_custom_call.1} parent=1 // loop_exit
      _
    %1147 = vsyncpa [#allocation5], 1
    %s1148 = scalar_lea.sflag [#allocation5], 1
    %1149 = vsyncpa %s1148, 1
    %1150 = vsyncpa [#allocation6], 1
    %s1151 = scalar_lea.sflag [#allocation6], 1
    %1152 = vsyncpa %s1151, 1

</llo_original>
